<compile_context>
chip_gen: v6e
topology: v6e:2x2x1
jax: 0.10.0
libtpu: 0.0.40
codegen_flags: <defaults>
</compile_context>

<pallas_src>
import jax
import jax.numpy as jnp
from jax import lax
from jax.experimental import pallas as pl
from jax.experimental.pallas import tpu as pltpu


def _cdiv(a, b):
    return -(-a // b)


def _round_up(a, b):
    return ((a + b - 1) // b) * b


def _make_mlp_kernel(n_linear: int, output_function: str):
    """Build a fused lane-dense MLP forward kernel for `n_linear` Linear layers.

    Kernel signature: (x_ref, w0, b0, w1, b1, ..., out_ref)
      x_ref   : (TM, in)         -- batch on sublanes (as stored in HBM)
      w_i     : (out_i, in_i)    -- native PyTorch layout, feeds MXU as LHS
      b_i     : (out_i, 1)       -- broadcast along lanes
      out_ref : (out_size, TM)   -- batch on lanes -> fully dense stores
    """

    def kernel(x_ref, *refs):
        out_ref = refs[-1]
        param_refs = refs[:-1]

        x = x_ref[...].astype(jnp.float32)          # (TM, in)
        w0 = param_refs[0][...]                     # (h0, in)
        b0 = param_refs[1][...]                     # (h0, 1)

        # First layer: contract the feature axis of both operands (A @ B^T pattern)
        # -> (h0, TM): batch lands on the lane axis, no explicit transpose of x.
        h = lax.dot_general(
            w0, x, (((1,), (1,)), ((), ())),
            preferred_element_type=jnp.float32) + b0
        if n_linear > 1:
            h = jnp.maximum(h, 0.0)                 # ReLU (VPU, lane-dense)

        for i in range(1, n_linear):
            w = param_refs[2 * i][...]              # (out_i, in_i)
            b = param_refs[2 * i + 1][...]          # (out_i, 1)
            # Native MXU orientation: (out_i, in_i) @ (in_i, TM) -> (out_i, TM).
            h = jnp.dot(w, h, preferred_element_type=jnp.float32) + b
            if i < n_linear - 1:
                h = jnp.maximum(h, 0.0)

        if output_function == "softmax":
            # Softmax over the feature axis (axis 0) -> per-lane (per-sample) softmax.
            m = jnp.max(h, axis=0, keepdims=True)           # (1, TM)
            e = jnp.exp(h - m)                              # EUP, lane-dense
            denom = jnp.sum(e, axis=0, keepdims=True)       # (1, TM)
            # EUP approx reciprocal (~2^-14) + one Newton-Raphson step -> full f32.
            r = pl.reciprocal(denom, approx=True)
            r = r * (2.0 - denom * r)
            h = e * r
        elif output_function == "tanh":
            h = jnp.tanh(h)

        out_ref[...] = h.astype(out_ref.dtype)              # (out_size, TM), dense vst

    return kernel


def ffnet_forward(x, weights, biases, output_function="softmax", block_batch=2048):
    """Run the FFnet forward pass in one Pallas call.

    x:       (batch, input_size) or (input_size,) float32
    weights: list of (out_i, in_i) float32 arrays (PyTorch layout, used as-is)
    biases:  list of (out_i,)      float32 arrays
    Returns (batch, output_size) (or (output_size,) for 1-D input).
    """
    assert len(weights) == len(biases)
    squeeze_out = False
    if x.ndim == 1:                      # mirrors the module's 1-D forward path
        x = x.reshape(1, -1)
        squeeze_out = True
    assert x.ndim == 2

    out_fn = str(output_function).lower()
    n_linear = len(weights)
    batch, in_size = x.shape
    out_size = weights[-1].shape[0]

    x = jnp.asarray(x, jnp.float32)      # no pad, no extra HBM pass

    # --- batch tile selection (TM lives on the LANE axis of activations/output) ---
    # Multi-block path needs TM % 128 == 0 (lane tiling of the (out, batch) output);
    # the single-block path (TM == batch) is always a legal full-extent block.
    _SINGLE_BLOCK_MAX = 256
    if batch <= _SINGLE_BLOCK_MAX:
        tm = batch
        n_blocks = 1
    else:
        lane_block = max(128, (int(block_batch) // 128) * 128)
        # Cap at ceil(batch/2) so there are always >= 2 blocks: the "parallel"
        # batch axis then shards across both v7x TensorCores (harmless on v5e/v6e).
        tm = min(lane_block, _round_up(_cdiv(batch, 2), 128))
        n_blocks = _cdiv(batch, tm)

    # --- params: native (out, in) weights; biases as (out, 1) lane-broadcast cols ---
    params = []
    for w, b in zip(weights, biases):
        params.append(jnp.asarray(w, jnp.float32))                 # (out_i, in_i)
        params.append(jnp.asarray(b, jnp.float32).reshape(-1, 1))  # (out_i, 1)

    kernel = _make_mlp_kernel(n_linear, out_fn)

    # x tiled along batch (sublanes); params VMEM-resident (constant index_map);
    # output tiled along batch on the LANE axis -> fully dense stores.
    in_specs = [pl.BlockSpec((tm, in_size), lambda i: (i, 0))]
    for p in params:
        in_specs.append(pl.BlockSpec(p.shape, lambda i: (0, 0)))
    out_spec = pl.BlockSpec((out_size, tm), lambda i: (0, i))

    # --- explicit VMEM budget: double-buffered x/out blocks + params + activations ---
    max_width = max([in_size] + [int(w.shape[0]) for w in weights])
    param_bytes = sum(int(p.size) for p in params) * 4
    working = 2 * tm * (in_size + out_size) * 4      # double-buffered x/out blocks
    working += 2 * param_bytes                        # params (conservatively x2)
    working += 8 * tm * max_width * 4                 # activation temporaries headroom
    vmem_limit = int(min(max(2 * working, 4 << 20), 32 << 20))

    fn = pl.pallas_call(
        kernel,
        out_shape=jax.ShapeDtypeStruct((out_size, batch), jnp.float32),
        grid=(n_blocks,),
        in_specs=in_specs,
        out_specs=out_spec,
        compiler_params=pltpu.CompilerParams(
            dimension_semantics=("parallel",),   # megacore split on v7x
            vmem_limit_bytes=vmem_limit,
        ),
    )
    out_t = fn(x, *params)                       # (out_size, batch), ragged writes masked

    # Layout plumbing only: transpose the narrow (out_size, batch) slab back to the
    # module's (batch, out_size) convention.
    out = out_t.T
    if squeeze_out:
        out = out[0]
    return out


def init_ffnet_params(key, input_size, output_size, hidden_layers, layer_std=1.0):
    """Weights ~ U(-s/sqrt(fan_in), s/sqrt(fan_in)); biases ~ U(-1/sqrt(fan_in), 1/sqrt(fan_in))."""
    sizes = [input_size] + list(hidden_layers) + [output_size]
    weights, biases = [], []
    for i in range(len(sizes) - 1):
        fan_in, fan_out = sizes[i], sizes[i + 1]
        key, kw, kb = jax.random.split(key, 3)
        bound_w = layer_std / jnp.sqrt(fan_in)
        bound_b = 1.0 / jnp.sqrt(fan_in)
        w = jax.random.uniform(kw, (fan_out, fan_in), jnp.float32,
                               minval=-bound_w, maxval=bound_w)
        b = jax.random.uniform(kb, (fan_out,), jnp.float32,
                               minval=-bound_b, maxval=bound_b)
        weights.append(w)
        biases.append(b)
    return weights, biases


def ffnet_reference(x, weights, biases, output_function="softmax"):
    """Pure-JAX reference for correctness checking."""
    h = x
    for i, (w, b) in enumerate(zip(weights, biases)):
        h = h @ w.T + b
        if i < len(weights) - 1:
            h = jnp.maximum(h, 0.0)
    if str(output_function).lower() == "softmax":
        return jax.nn.softmax(h, axis=-1)
    if str(output_function).lower() == "tanh":
        return jnp.tanh(h)
    return h


if __name__ == "__main__":
    input_size = 16
    hidden_layers = (32, 32)
    output_size = 8

    key = jax.random.PRNGKey(0)
    key, kx1, kx2, kx3 = jax.random.split(key, 4)
    weights, biases = init_ffnet_params(
        key, input_size, output_size, hidden_layers, layer_std=1.0
    )

    # --- small case consistent with the module (batch=2): single full-array block ---
    x_small = jax.random.normal(kx1, (2, input_size), jnp.float32)
    out_small = jax.block_until_ready(
        ffnet_forward(x_small, weights, biases, output_function="softmax")
    )
    ref_small = ffnet_reference(x_small, weights, biases, output_function="softmax")
    assert out_small.shape == (2, output_size)
    assert jnp.allclose(out_small, ref_small, atol=1e-5, rtol=1e-5), "mismatch (small)"
    assert jnp.allclose(jnp.sum(out_small, axis=1), jnp.ones(2), atol=1e-5)

    # --- larger, non-divisible batch: 2 ragged lane-tiled blocks (megacore path) ---
    x_big = jax.random.normal(kx2, (600, input_size), jnp.float32)
    out_big = jax.block_until_ready(
        ffnet_forward(x_big, weights, biases, output_function="softmax",
                      block_batch=2048)
    )
    ref_big = ffnet_reference(x_big, weights, biases, output_function="softmax")
    assert out_big.shape == (600, output_size)
    assert jnp.allclose(out_big, ref_big, atol=1e-5, rtol=1e-5), "mismatch (big)"
    assert jnp.allclose(jnp.sum(out_big, axis=1), jnp.ones(600), atol=1e-5)

    # --- 1-D input path (module's softmax dim=0 branch) ---
    x_vec = jax.random.normal(kx3, (input_size,), jnp.float32)
    out_vec = jax.block_until_ready(
        ffnet_forward(x_vec, weights, biases, output_function="softmax")
    )
    ref_vec = ffnet_reference(x_vec.reshape(1, -1), weights, biases, "softmax")[0]
    assert out_vec.shape == (output_size,)
    assert jnp.allclose(out_vec, ref_vec, atol=1e-5, rtol=1e-5), "mismatch (1-D)"

    # --- tanh output head ---
    out_tanh = jax.block_until_ready(
        ffnet_forward(x_small, weights, biases, output_function="tanh")
    )
    ref_tanh = ffnet_reference(x_small, weights, biases, output_function="tanh")
    assert jnp.allclose(out_tanh, ref_tanh, atol=1e-5, rtol=1e-5), "mismatch (tanh)"

    print("KERNEL_OK")
</pallas_src>

<mosaic_0001>
module attributes {stable_mosaic.version = 11 : i64} {
  func.func @kernel(%arg0: i32, %arg1: memref<2x16xf32, #tpu.memory_space<vmem>>, %arg2: memref<32x16xf32, #tpu.memory_space<vmem>>, %arg3: memref<32x1xf32, #tpu.memory_space<vmem>>, %arg4: memref<32x32xf32, #tpu.memory_space<vmem>>, %arg5: memref<32x1xf32, #tpu.memory_space<vmem>>, %arg6: memref<8x32xf32, #tpu.memory_space<vmem>>, %arg7: memref<8x1xf32, #tpu.memory_space<vmem>>, %arg8: memref<8x2xf32, #tpu.memory_space<vmem>>) attributes {dimension_semantics = [#tpu.dimension_semantics<parallel>], iteration_bounds = array<i64: 1>, scalar_prefetch = 0 : i64, scratch_operands = 0 : i64, tpu.core_type = #tpu.core_type<tc>, window_params = [{transform_indices = @transform_0, window_bounds = array<i64: 2, 16>}, {pipeline_mode = #tpu.pipeline_mode<synchronous>, transform_indices = @transform_1, window_bounds = array<i64: 32, 16>}, {pipeline_mode = #tpu.pipeline_mode<synchronous>, transform_indices = @transform_2, window_bounds = array<i64: 32, 1>}, {pipeline_mode = #tpu.pipeline_mode<synchronous>, transform_indices = @transform_3, window_bounds = array<i64: 32, 32>}, {pipeline_mode = #tpu.pipeline_mode<synchronous>, transform_indices = @transform_4, window_bounds = array<i64: 32, 1>}, {pipeline_mode = #tpu.pipeline_mode<synchronous>, transform_indices = @transform_5, window_bounds = array<i64: 8, 32>}, {pipeline_mode = #tpu.pipeline_mode<synchronous>, transform_indices = @transform_6, window_bounds = array<i64: 8, 1>}, {transform_indices = @transform_7, window_bounds = array<i64: 8, 2>}]} {
    %c0 = arith.constant 0 : index
    %c0_0 = arith.constant 0 : index
    %0 = vector.load %arg1[%c0, %c0_0] : memref<2x16xf32, #tpu.memory_space<vmem>>, vector<2x16xf32>
    %c0_1 = arith.constant 0 : index
    %c0_2 = arith.constant 0 : index
    %1 = vector.load %arg2[%c0_1, %c0_2] : memref<32x16xf32, #tpu.memory_space<vmem>>, vector<32x16xf32>
    %c0_3 = arith.constant 0 : index
    %c0_4 = arith.constant 0 : index
    %2 = vector.load %arg3[%c0_3, %c0_4] : memref<32x1xf32, #tpu.memory_space<vmem>>, vector<32x1xf32>
    %cst = arith.constant dense<0.000000e+00> : vector<32x2xf32>
    %3 = tpu.matmul %1, %0, %cst {dimension_numbers = #tpu.dot_dimension_numbers<[1], [1], [0], [0], [0, 0, 1, 0], [], []>} : vector<32x16xf32>, vector<2x16xf32>, vector<32x2xf32> -> vector<32x2xf32>
    %4 = vector.broadcast %2 : vector<32x1xf32> to vector<32x2xf32>
    %5 = arith.addf %3, %4 : vector<32x2xf32>
    %cst_5 = arith.constant 0.000000e+00 : f32
    %6 = vector.broadcast %cst_5 : f32 to vector<32x2xf32>
    %7 = arith.maximumf %5, %6 : vector<32x2xf32>
    %c0_6 = arith.constant 0 : index
    %c0_7 = arith.constant 0 : index
    %8 = vector.load %arg4[%c0_6, %c0_7] : memref<32x32xf32, #tpu.memory_space<vmem>>, vector<32x32xf32>
    %c0_8 = arith.constant 0 : index
    %c0_9 = arith.constant 0 : index
    %9 = vector.load %arg5[%c0_8, %c0_9] : memref<32x1xf32, #tpu.memory_space<vmem>>, vector<32x1xf32>
    %cst_10 = arith.constant dense<0.000000e+00> : vector<32x2xf32>
    %10 = tpu.matmul %8, %7, %cst_10 {dimension_numbers = #tpu.dot_dimension_numbers<[1], [0], [0], [1], [0, 0, 1, 1], [], []>} : vector<32x32xf32>, vector<32x2xf32>, vector<32x2xf32> -> vector<32x2xf32>
    %11 = vector.broadcast %9 : vector<32x1xf32> to vector<32x2xf32>
    %12 = arith.addf %10, %11 : vector<32x2xf32>
    %cst_11 = arith.constant 0.000000e+00 : f32
    %13 = vector.broadcast %cst_11 : f32 to vector<32x2xf32>
    %14 = arith.maximumf %12, %13 : vector<32x2xf32>
    %c0_12 = arith.constant 0 : index
    %c0_13 = arith.constant 0 : index
    %15 = vector.load %arg6[%c0_12, %c0_13] : memref<8x32xf32, #tpu.memory_space<vmem>>, vector<8x32xf32>
    %c0_14 = arith.constant 0 : index
    %c0_15 = arith.constant 0 : index
    %16 = vector.load %arg7[%c0_14, %c0_15] : memref<8x1xf32, #tpu.memory_space<vmem>>, vector<8x1xf32>
    %cst_16 = arith.constant dense<0.000000e+00> : vector<8x2xf32>
    %17 = tpu.matmul %15, %14, %cst_16 {dimension_numbers = #tpu.dot_dimension_numbers<[1], [0], [0], [1], [0, 0, 1, 1], [], []>} : vector<8x32xf32>, vector<32x2xf32>, vector<8x2xf32> -> vector<8x2xf32>
    %18 = vector.broadcast %16 : vector<8x1xf32> to vector<8x2xf32>
    %19 = arith.addf %17, %18 : vector<8x2xf32>
    %cst_17 = arith.constant dense<0xFF800000> : vector<2xf32>
    %20 = vector.multi_reduction <maximumf>, %19, %cst_17 [0] : vector<8x2xf32> to vector<2xf32>
    %21 = vector.shape_cast %20 : vector<2xf32> to vector<1x2xf32>
    %22 = vector.broadcast %21 : vector<1x2xf32> to vector<8x2xf32>
    %23 = arith.subf %19, %22 : vector<8x2xf32>
    %24 = math.exp %23 : vector<8x2xf32>
    %cst_18 = arith.constant dense<0.000000e+00> : vector<2xf32>
    %25 = vector.multi_reduction <add>, %24, %cst_18 [0] : vector<8x2xf32> to vector<2xf32>
    %26 = vector.shape_cast %25 : vector<2xf32> to vector<1x2xf32>
    %27 = tpu.reciprocal %26 {approx = true} : vector<1x2xf32> -> vector<1x2xf32>
    %28 = arith.mulf %26, %27 : vector<1x2xf32>
    %cst_19 = arith.constant 2.000000e+00 : f32
    %29 = vector.broadcast %cst_19 : f32 to vector<1x2xf32>
    %30 = arith.subf %29, %28 : vector<1x2xf32>
    %31 = arith.mulf %27, %30 : vector<1x2xf32>
    %32 = vector.broadcast %31 : vector<1x2xf32> to vector<8x2xf32>
    %33 = arith.mulf %24, %32 : vector<8x2xf32>
    %c0_20 = arith.constant 0 : index
    %c0_21 = arith.constant 0 : index
    %34 = vector.load %arg8[%c0_20, %c0_21] : memref<8x2xf32, #tpu.memory_space<vmem>>, vector<8x2xf32>
    tpu.vector_store %arg8[%c0_20, %c0_21], %33 {strides = array<i32>} : memref<8x2xf32, #tpu.memory_space<vmem>>, vector<8x2xf32>,
    return
  }
  func.func @transform_0(%arg0: i32) -> (i32, i32) {
    %c0_i32 = arith.constant 0 : i32
    %c0_i32_0 = arith.constant 0 : i32
    return %arg0, %c0_i32 : i32, i32
  }
  func.func @transform_1(%arg0: i32) -> (i32, i32) {
    %c0_i32 = arith.constant 0 : i32
    %c0_i32_0 = arith.constant 0 : i32
    %c0_i32_1 = arith.constant 0 : i32
    return %c0_i32, %c0_i32_0 : i32, i32
  }
  func.func @transform_2(%arg0: i32) -> (i32, i32) {
    %c0_i32 = arith.constant 0 : i32
    %c0_i32_0 = arith.constant 0 : i32
    %c0_i32_1 = arith.constant 0 : i32
    return %c0_i32, %c0_i32_0 : i32, i32
  }
  func.func @transform_3(%arg0: i32) -> (i32, i32) {
    %c0_i32 = arith.constant 0 : i32
    %c0_i32_0 = arith.constant 0 : i32
    %c0_i32_1 = arith.constant 0 : i32
    return %c0_i32, %c0_i32_0 : i32, i32
  }
  func.func @transform_4(%arg0: i32) -> (i32, i32) {
    %c0_i32 = arith.constant 0 : i32
    %c0_i32_0 = arith.constant 0 : i32
    %c0_i32_1 = arith.constant 0 : i32
    return %c0_i32, %c0_i32_0 : i32, i32
  }
  func.func @transform_5(%arg0: i32) -> (i32, i32) {
    %c0_i32 = arith.constant 0 : i32
    %c0_i32_0 = arith.constant 0 : i32
    %c0_i32_1 = arith.constant 0 : i32
    return %c0_i32, %c0_i32_0 : i32, i32
  }
  func.func @transform_6(%arg0: i32) -> (i32, i32) {
    %c0_i32 = arith.constant 0 : i32
    %c0_i32_0 = arith.constant 0 : i32
    %c0_i32_1 = arith.constant 0 : i32
    return %c0_i32, %c0_i32_0 : i32, i32
  }
  func.func @transform_7(%arg0: i32) -> (i32, i32) {
    %c0_i32 = arith.constant 0 : i32
    %c0_i32_0 = arith.constant 0 : i32
    return %c0_i32, %arg0 : i32, i32
  }
}

</mosaic_0001>

<llo_original>
// kernel: tpu_custom_call.1
$region0: #{tpu_custom_call.1}
  #allocation0 [shape = 'u32[]', space=smem, size = 0x4, offset = 0x4, fixed_abs, tag = 'smem constant byte address 0x4 - core index']
  #allocation1 [shape = 'u32[144,128]{1,0:T(1,128)}', space=vmem, size = 0x12000, scoped, tag = 'internal scratch']
  %s0 = inlined_call_operand.vmem [shape: f32[2,16], index: 0, kind: input, shape index: {}]
  %s1 = inlined_call_operand.vmem [shape: f32[32,16], index: 1, kind: input, shape index: {}]
  %s2 = inlined_call_operand.vmem [shape: f32[32,1], index: 2, kind: input, shape index: {}]
  %s3 = inlined_call_operand.vmem [shape: f32[32,32], index: 3, kind: input, shape index: {}]
  %s4 = inlined_call_operand.vmem [shape: f32[32,1], index: 4, kind: input, shape index: {}]
  %s5 = inlined_call_operand.vmem [shape: f32[8,32], index: 5, kind: input, shape index: {}]
  %s6 = inlined_call_operand.vmem [shape: f32[8,1], index: 6, kind: input, shape index: {}]
  %s7 = inlined_call_operand.vmem [shape: f32[8,2], index: 7, kind: output, shape index: {}]
  %s8 = sld [smem:[#allocation0]]
  $region38: #{tpu_custom_call.1} parent=0
    _
  %s10 = ssub.s32 1, %s8
  %s11 = scalar_select 0, %s10, %s8
  // Predicated region
  $region2: #{tpu_custom_call.1} parent=0 // pred_check
    _
  $region3: #{tpu_custom_call.1} parent=0 // pred_check_branch
    %13 = sbr.rel (0) target = $region5
  $region4: #{tpu_custom_call.1} parent=0 // pred_region
    _
  $region5: #{tpu_custom_call.1} parent=0 // pred_fallthru
    _
  // Predicated region
  $region6: #{tpu_custom_call.1} parent=0 // pred_check
    _
  $region7: #{tpu_custom_call.1} parent=0 // pred_check_branch
    %15 = sbr.rel (0) target = $region9
  $region8: #{tpu_custom_call.1} parent=0 // pred_region
    _
  $region9: #{tpu_custom_call.1} parent=0 // pred_fallthru
    _
  // Predicated region
  $region10: #{tpu_custom_call.1} parent=0 // pred_check
    _
  $region11: #{tpu_custom_call.1} parent=0 // pred_check_branch
    %17 = sbr.rel (0) target = $region13
  $region12: #{tpu_custom_call.1} parent=0 // pred_region
    _
  $region13: #{tpu_custom_call.1} parent=0 // pred_fallthru
    _
  // Predicated region
  $region14: #{tpu_custom_call.1} parent=0 // pred_check
    _
  $region15: #{tpu_custom_call.1} parent=0 // pred_check_branch
    %19 = sbr.rel (0) target = $region17
  $region16: #{tpu_custom_call.1} parent=0 // pred_region
    _
  $region17: #{tpu_custom_call.1} parent=0 // pred_fallthru
    _
  // Predicated region
  $region18: #{tpu_custom_call.1} parent=0 // pred_check
    _
  $region19: #{tpu_custom_call.1} parent=0 // pred_check_branch
    %21 = sbr.rel (0) target = $region21
  $region20: #{tpu_custom_call.1} parent=0 // pred_region
    _
  $region21: #{tpu_custom_call.1} parent=0 // pred_fallthru
    _
  // Predicated region
  $region22: #{tpu_custom_call.1} parent=0 // pred_check
    _
  $region23: #{tpu_custom_call.1} parent=0 // pred_check_branch
    %23 = sbr.rel (0) target = $region25
  $region24: #{tpu_custom_call.1} parent=0 // pred_region
    _
  $region25: #{tpu_custom_call.1} parent=0 // pred_fallthru
    _
  // Predicated region
  $region26: #{tpu_custom_call.1} parent=0 // pred_check
    _
  $region27: #{tpu_custom_call.1} parent=0 // pred_check_branch
    %25 = sbr.rel (0) target = $region29
  $region28: #{tpu_custom_call.1} parent=0 // pred_region
    _
  $region29: #{tpu_custom_call.1} parent=0 // pred_fallthru
    _
  %v26 = vld [vmem:[%s0] sm:$0x3]
  %v27 = vld [vmem:[%s1] sm:$0xff]
  %v28 = vld [vmem:[%s1 + $0x8] sm:$0xff]
  %v29 = vld [vmem:[%s1 + $0x10] sm:$0xff]
  %v30 = vld [vmem:[%s1 + $0x18] sm:$0xff]
  %v31 = vld [vmem:[%s2] sm:$0xff]
  %v32 = vld [vmem:[%s2 + $0x8] sm:$0xff]
  %v33 = vld [vmem:[%s2 + $0x10] sm:$0xff]
  %v34 = vld [vmem:[%s2 + $0x18] sm:$0xff]
  %36 = vset.pattern.permute.xlu0 0
  %37 = vperm.xlu0 %36, %v31
  %v38 = vpop.permute.xlu0 %37
  %41 = vset.pattern.permute.xlu0 0
  %42 = vperm.xlu0 %41, %v32
  %v43 = vpop.permute.xlu0 %42
  %46 = vset.pattern.permute.xlu0 0
  %47 = vperm.xlu0 %46, %v33
  %v48 = vpop.permute.xlu0 %47
  %51 = vset.pattern.permute.xlu0 0
  %52 = vperm.xlu0 %51, %v34
  %v53 = vpop.permute.xlu0 %52
  %vm55 = vcmask 130048
  %v57 = vsel %vm55, %v27, 0
  %v60 = vsel %vm55, %v28, 0
  %v63 = vsel %vm55, %v29, 0
  %v66 = vsel %vm55, %v30, 0
  %v69 = vsel %vm55, %v26, 0
  %71 = vmatprep.subr.mxu0 0.0
  %72 = vmatpush1.xpose.msra.mxu0 0.0
  %73 = vmatprep.subr.mxu0 0.0
  %74 = vmatpush1.xpose.msra.mxu0 0.0
  %75 = vmatprep.subr.mxu0 0.0
  %76 = vmatpush1.xpose.msra.mxu0 0.0
  %77 = vmatprep.subr.mxu0 0.0
  %78 = vmatpush1.xpose.msra.mxu0 0.0
  %79 = vmatprep.subr.mxu0 0.0
  %80 = vmatpush1.xpose.msra.mxu0 0.0
  %81 = vmatprep.subr.mxu0 0.0
  %82 = vmatpush1.xpose.msra.mxu0 0.0
  %83 = vmatprep.subr.mxu0 0.0
  %84 = vmatpush1.xpose.msra.mxu0 0.0
  %85 = vmatprep.subr.mxu0 0.0
  %86 = vmatpush1.xpose.msra.mxu0 0.0
  %87 = vmatprep.subr.mxu0 0.0
  %88 = vmatpush1.xpose.msra.mxu0 0.0
  %89 = vmatprep.subr.mxu0 0.0
  %90 = vmatpush1.xpose.msra.mxu0 0.0
  %91 = vmatprep.subr.mxu0 0.0
  %92 = vmatpush1.xpose.msra.mxu0 0.0
  %93 = vmatprep.subr.mxu0 0.0
  %94 = vmatpush1.xpose.msra.mxu0 0.0
  %95 = vmatprep.subr.mxu0 0.0
  %96 = vmatpush1.xpose.msra.mxu0 0.0
  %97 = vmatprep.subr.mxu0 0.0
  %98 = vmatpush1.xpose.msra.mxu0 0.0
  %99 = vmatprep.subr.mxu0 0.0
  %100 = vmatpush1.xpose.msra.mxu0 0.0
  %101 = vmatprep.subr.mxu0 0.0
  %102 = vmatpush1.xpose.msra.mxu0 %v69
  %103 = vmatprep.subr.mxu0 0.0
  %104 = vmatpush2.xpose.msra.mxu0 0.0
  %105 = vmatprep.subr.mxu0 0.0
  %106 = vmatpush2.xpose.msra.mxu0 0.0
  %107 = vmatprep.subr.mxu0 0.0
  %108 = vmatpush2.xpose.msra.mxu0 0.0
  %109 = vmatprep.subr.mxu0 0.0
  %110 = vmatpush2.xpose.msra.mxu0 0.0
  %111 = vmatprep.subr.mxu0 0.0
  %112 = vmatpush2.xpose.msra.mxu0 0.0
  %113 = vmatprep.subr.mxu0 0.0
  %114 = vmatpush2.xpose.msra.mxu0 0.0
  %115 = vmatprep.subr.mxu0 0.0
  %116 = vmatpush2.xpose.msra.mxu0 0.0
  %117 = vmatprep.subr.mxu0 0.0
  %118 = vmatpush2.xpose.msra.mxu0 0.0
  %119 = vmatprep.subr.mxu0 0.0
  %120 = vmatpush2.xpose.msra.mxu0 0.0
  %121 = vmatprep.subr.mxu0 0.0
  %122 = vmatpush2.xpose.msra.mxu0 0.0
  %123 = vmatprep.subr.mxu0 0.0
  %124 = vmatpush2.xpose.msra.mxu0 0.0
  %125 = vmatprep.subr.mxu0 0.0
  %126 = vmatpush2.xpose.msra.mxu0 0.0
  %127 = vmatprep.subr.mxu0 0.0
  %128 = vmatpush2.xpose.msra.mxu0 0.0
  %129 = vmatprep.subr.mxu0 0.0
  %130 = vmatpush2.xpose.msra.mxu0 0.0
  %131 = vmatprep.subr.mxu0 0.0
  %132 = vmatpush2.xpose.msra.mxu0 0.0
  %133 = vmatprep.subr.mxu0 0.0
  %134 = vmatpush2.xpose.msra.mxu0 0.0
  %135 = vmatprep.mubr.f32.mxu0 0.0
  %136 = vmatmul.mubr.f32.gmra.mxu0 %v57
  %v137 = vpop.f32.mrf.mxu0
  %v138 = vadd.f32 %v38, %v137
  %v139 = vpop.f32.mrf.mxu0
  %140 = vmatprep.mubr.f32.mxu0 0.0
  %141 = vmatmul.mubr.f32.gmra.mxu0 %v60
  %v142 = vpop.f32.mrf.mxu0
  %v143 = vadd.f32 %v43, %v142
  %v144 = vpop.f32.mrf.mxu0
  %145 = vmatprep.mubr.f32.mxu0 0.0
  %146 = vmatmul.mubr.f32.gmra.mxu0 %v63
  %v147 = vpop.f32.mrf.mxu0
  %v148 = vadd.f32 %v48, %v147
  %v149 = vpop.f32.mrf.mxu0
  %150 = vmatprep.mubr.f32.mxu0 0.0
  %151 = vmatmul.mubr.f32.gmra.mxu0 %v66
  %v152 = vpop.f32.mrf.mxu0
  %v153 = vadd.f32 %v53, %v152
  %v154 = vpop.f32.mrf.mxu0
  %155 = vdwg.mxu0
  %v156 = vmax.f32 %v138, 0.0
  %v157 = vmax.f32 %v143, 0.0
  %v158 = vmax.f32 %v148, 0.0
  %v159 = vmax.f32 %v153, 0.0
  %v160 = vld [vmem:[%s3] sm:$0xff]
  %v161 = vld [vmem:[%s3 + $0x8] sm:$0xff]
  %v162 = vld [vmem:[%s3 + $0x10] sm:$0xff]
  %v163 = vld [vmem:[%s3 + $0x18] sm:$0xff]
  %v164 = vld [vmem:[%s4] sm:$0xff]
  %v165 = vld [vmem:[%s4 + $0x8] sm:$0xff]
  %v166 = vld [vmem:[%s4 + $0x10] sm:$0xff]
  %v167 = vld [vmem:[%s4 + $0x18] sm:$0xff]
  %169 = vset.pattern.permute.xlu0 0
  %170 = vperm.xlu0 %169, %v164
  %v171 = vpop.permute.xlu0 %170
  %174 = vset.pattern.permute.xlu0 0
  %175 = vperm.xlu0 %174, %v165
  %v176 = vpop.permute.xlu0 %175
  %179 = vset.pattern.permute.xlu0 0
  %180 = vperm.xlu0 %179, %v166
  %v181 = vpop.permute.xlu0 %180
  %184 = vset.pattern.permute.xlu0 0
  %185 = vperm.xlu0 %184, %v167
  %v186 = vpop.permute.xlu0 %185
  %vm188 = vcmask 261120
  %v190 = vsel %vm188, %v160, 0
  %v193 = vsel %vm188, %v161, 0
  %v196 = vsel %vm188, %v162, 0
  %v199 = vsel %vm188, %v163, 0
  %201 = vmatprep.subr.mxu0 0.0
  %202 = vmatpush1.msra.mxu0 0.0
  %203 = vmatprep.subr.mxu0 0.0
  %204 = vmatpush1.msra.mxu0 0.0
  %205 = vmatprep.subr.mxu0 0.0
  %206 = vmatpush1.msra.mxu0 0.0
  %207 = vmatprep.subr.mxu0 0.0
  %208 = vmatpush1.msra.mxu0 0.0
  %209 = vmatprep.subr.mxu0 0.0
  %210 = vmatpush1.msra.mxu0 0.0
  %211 = vmatprep.subr.mxu0 0.0
  %212 = vmatpush1.msra.mxu0 0.0
  %213 = vmatprep.subr.mxu0 0.0
  %214 = vmatpush1.msra.mxu0 0.0
  %215 = vmatprep.subr.mxu0 0.0
  %216 = vmatpush1.msra.mxu0 0.0
  %217 = vmatprep.subr.mxu0 0.0
  %218 = vmatpush1.msra.mxu0 0.0
  %219 = vmatprep.subr.mxu0 0.0
  %220 = vmatpush1.msra.mxu0 0.0
  %221 = vmatprep.subr.mxu0 0.0
  %222 = vmatpush1.msra.mxu0 0.0
  %223 = vmatprep.subr.mxu0 0.0
  %224 = vmatpush1.msra.mxu0 0.0
  %225 = vmatprep.subr.mxu0 0.0
  %226 = vmatpush1.msra.mxu0 %v159
  %227 = vmatprep.subr.mxu0 0.0
  %228 = vmatpush1.msra.mxu0 %v158
  %229 = vmatprep.subr.mxu0 0.0
  %230 = vmatpush1.msra.mxu0 %v157
  %231 = vmatprep.subr.mxu0 0.0
  %232 = vmatpush1.msra.mxu0 %v156
  %233 = vmatprep.subr.mxu0 0.0
  %234 = vmatpush2.msra.mxu0 0.0
  %235 = vmatprep.subr.mxu0 0.0
  %236 = vmatpush2.msra.mxu0 0.0
  %237 = vmatprep.subr.mxu0 0.0
  %238 = vmatpush2.msra.mxu0 0.0
  %239 = vmatprep.subr.mxu0 0.0
  %240 = vmatpush2.msra.mxu0 0.0
  %241 = vmatprep.subr.mxu0 0.0
  %242 = vmatpush2.msra.mxu0 0.0
  %243 = vmatprep.subr.mxu0 0.0
  %244 = vmatpush2.msra.mxu0 0.0
  %245 = vmatprep.subr.mxu0 0.0
  %246 = vmatpush2.msra.mxu0 0.0
  %247 = vmatprep.subr.mxu0 0.0
  %248 = vmatpush2.msra.mxu0 0.0
  %249 = vmatprep.subr.mxu0 0.0
  %250 = vmatpush2.msra.mxu0 0.0
  %251 = vmatprep.subr.mxu0 0.0
  %252 = vmatpush2.msra.mxu0 0.0
  %253 = vmatprep.subr.mxu0 0.0
  %254 = vmatpush2.msra.mxu0 0.0
  %255 = vmatprep.subr.mxu0 0.0
  %256 = vmatpush2.msra.mxu0 0.0
  %257 = vmatprep.subr.mxu0 0.0
  %258 = vmatpush2.msra.mxu0 0.0
  %259 = vmatprep.subr.mxu0 0.0
  %260 = vmatpush2.msra.mxu0 0.0
  %261 = vmatprep.subr.mxu0 0.0
  %262 = vmatpush2.msra.mxu0 0.0
  %263 = vmatprep.subr.mxu0 0.0
  %264 = vmatpush2.msra.mxu0 0.0
  %265 = vmatprep.mubr.f32.mxu0 0.0
  %266 = vmatmul.mubr.f32.gmra.mxu0 %v190
  %v267 = vpop.f32.mrf.mxu0
  %v268 = vadd.f32 %v171, %v267
  %v269 = vpop.f32.mrf.mxu0
  %270 = vmatprep.mubr.f32.mxu0 0.0
  %271 = vmatmul.mubr.f32.gmra.mxu0 %v193
  %v272 = vpop.f32.mrf.mxu0
  %v273 = vadd.f32 %v176, %v272
  %v274 = vpop.f32.mrf.mxu0
  %275 = vmatprep.mubr.f32.mxu0 0.0
  %276 = vmatmul.mubr.f32.gmra.mxu0 %v196
  %v277 = vpop.f32.mrf.mxu0
  %v278 = vadd.f32 %v181, %v277
  %v279 = vpop.f32.mrf.mxu0
  %280 = vmatprep.mubr.f32.mxu0 0.0
  %281 = vmatmul.mubr.f32.gmra.mxu0 %v199
  %v282 = vpop.f32.mrf.mxu0
  %v283 = vadd.f32 %v186, %v282
  %v284 = vpop.f32.mrf.mxu0
  %285 = vdwg.mxu0
  %v286 = vmax.f32 %v268, 0.0
  %v287 = vmax.f32 %v273, 0.0
  %v288 = vmax.f32 %v278, 0.0
  %v289 = vmax.f32 %v283, 0.0
  %v290 = vld [vmem:[%s5] sm:$0xff]
  %v291 = vld [vmem:[%s6] sm:$0xff]
  %293 = vset.pattern.permute.xlu0 0
  %294 = vperm.xlu0 %293, %v291
  %v295 = vpop.permute.xlu0 %294
  %v298 = vsel %vm188, %v290, 0
  %300 = vmatprep.subr.mxu0 0.0
  %301 = vmatpush1.msra.mxu0 0.0
  %302 = vmatprep.subr.mxu0 0.0
  %303 = vmatpush1.msra.mxu0 0.0
  %304 = vmatprep.subr.mxu0 0.0
  %305 = vmatpush1.msra.mxu0 0.0
  %306 = vmatprep.subr.mxu0 0.0
  %307 = vmatpush1.msra.mxu0 0.0
  %308 = vmatprep.subr.mxu0 0.0
  %309 = vmatpush1.msra.mxu0 0.0
  %310 = vmatprep.subr.mxu0 0.0
  %311 = vmatpush1.msra.mxu0 0.0
  %312 = vmatprep.subr.mxu0 0.0
  %313 = vmatpush1.msra.mxu0 0.0
  %314 = vmatprep.subr.mxu0 0.0
  %315 = vmatpush1.msra.mxu0 0.0
  %316 = vmatprep.subr.mxu0 0.0
  %317 = vmatpush1.msra.mxu0 0.0
  %318 = vmatprep.subr.mxu0 0.0
  %319 = vmatpush1.msra.mxu0 0.0
  %320 = vmatprep.subr.mxu0 0.0
  %321 = vmatpush1.msra.mxu0 0.0
  %322 = vmatprep.subr.mxu0 0.0
  %323 = vmatpush1.msra.mxu0 0.0
  %324 = vmatprep.subr.mxu0 0.0
  %325 = vmatpush1.msra.mxu0 %v289
  %326 = vmatprep.subr.mxu0 0.0
  %327 = vmatpush1.msra.mxu0 %v288
  %328 = vmatprep.subr.mxu0 0.0
  %329 = vmatpush1.msra.mxu0 %v287
  %330 = vmatprep.subr.mxu0 0.0
  %331 = vmatpush1.msra.mxu0 %v286
  %332 = vmatprep.subr.mxu0 0.0
  %333 = vmatpush2.msra.mxu0 0.0
  %334 = vmatprep.subr.mxu0 0.0
  %335 = vmatpush2.msra.mxu0 0.0
  %336 = vmatprep.subr.mxu0 0.0
  %337 = vmatpush2.msra.mxu0 0.0
  %338 = vmatprep.subr.mxu0 0.0
  %339 = vmatpush2.msra.mxu0 0.0
  %340 = vmatprep.subr.mxu0 0.0
  %341 = vmatpush2.msra.mxu0 0.0
  %342 = vmatprep.subr.mxu0 0.0
  %343 = vmatpush2.msra.mxu0 0.0
  %344 = vmatprep.subr.mxu0 0.0
  %345 = vmatpush2.msra.mxu0 0.0
  %346 = vmatprep.subr.mxu0 0.0
  %347 = vmatpush2.msra.mxu0 0.0
  %348 = vmatprep.subr.mxu0 0.0
  %349 = vmatpush2.msra.mxu0 0.0
  %350 = vmatprep.subr.mxu0 0.0
  %351 = vmatpush2.msra.mxu0 0.0
  %352 = vmatprep.subr.mxu0 0.0
  %353 = vmatpush2.msra.mxu0 0.0
  %354 = vmatprep.subr.mxu0 0.0
  %355 = vmatpush2.msra.mxu0 0.0
  %356 = vmatprep.subr.mxu0 0.0
  %357 = vmatpush2.msra.mxu0 0.0
  %358 = vmatprep.subr.mxu0 0.0
  %359 = vmatpush2.msra.mxu0 0.0
  %360 = vmatprep.subr.mxu0 0.0
  %361 = vmatpush2.msra.mxu0 0.0
  %362 = vmatprep.subr.mxu0 0.0
  %363 = vmatpush2.msra.mxu0 0.0
  %364 = vmatprep.mubr.f32.mxu0 0.0
  %365 = vmatmul.mubr.f32.gmra.mxu0 %v298
  %v366 = vpop.f32.mrf.mxu0
  %v367 = vadd.f32 %v295, %v366
  %v368 = vpop.f32.mrf.mxu0
  %369 = vdwg.mxu0
  %vm370 = vcmask 15360
  %v371 = vsel %vm370, %v367, -inf
  %v372 = vrot.slane %v371, 4
  %v373 = vmax.f32 %v371, %v372
  %v374 = vrot.slane %v373, 2
  %v375 = vmax.f32 %v373, %v374
  %v376 = vrot.slane %v375, 1
  %v377 = vmax.f32 %v375, %v376
  %v378 = vsub.f32 %v367, %v377
  %v379 = vmul.f32 %v378, 1.442695
  %v380 = vpow.pop %v379
  %v381 = vsel %vm370, %v380, 0.0
  %v382 = vrot.slane %v381, 4
  %v383 = vadd.f32 %v381, %v382
  %v384 = vrot.slane %v383, 2
  %v385 = vadd.f32 %v383, %v384
  %v386 = vrot.slane %v385, 1
  %v387 = vadd.f32 %v385, %v386
  %v388 = vrcp.pop %v387
  %v389 = vmul.f32 %v387, %v388
  %v390 = vsub.f32 2.0, %v389
  %v391 = vmul.f32 %v388, %v390
  %v392 = vmul.f32 %v380, %v391
  %393 = vst.msk [vmem:[%s7] sm:$0xff] %vm370, %v392
  // Predicated region
  $region30: #{tpu_custom_call.1} parent=0 // pred_check
    _
  $region31: #{tpu_custom_call.1} parent=0 // pred_check_branch
    %395 = sbr.rel (0) target = $region33
  $region32: #{tpu_custom_call.1} parent=0 // pred_region
    _
  $region33: #{tpu_custom_call.1} parent=0 // pred_fallthru
    _
  // Predicated region
  $region34: #{tpu_custom_call.1} parent=0 // pred_check
    _
  $region35: #{tpu_custom_call.1} parent=0 // pred_check_branch
    %397 = sbr.rel (0) target = $region37
  $region36: #{tpu_custom_call.1} parent=0 // pred_region
    _
  $region37: #{tpu_custom_call.1} parent=0 // pred_fallthru
    _

</llo_original>
